<compile_context>
chip_gen: v5e
topology: v5e:2x2
jax: 0.10.0
libtpu: 0.0.40
codegen_flags: <defaults>
</compile_context>

<pallas_src>
import functools

import jax
import jax.numpy as jnp
from jax.experimental import pallas as pl
from jax.experimental.pallas import tpu as pltpu

GAMMA = 2.0  # module default FocalLoss(gamma=2); implemented as w*w below.


def _focal_loss_kernel(x_ref, t_ref, o_ref, *, tn, n_valid):
    # x_ref: (TN, C) logits tile, t_ref: (TN, 1) int32 targets tile,
    # o_ref: (1, 8, 128) per-block partial-sum slab.
    i = pl.program_id(0)
    x = x_ref[...].astype(jnp.float32)                          # (TN, C)
    t = t_ref[...]                                              # (TN, 1) int32
    _, c = x.shape

    # Rows past the true batch size (partial last block -> OOB reads return
    # unspecified data): zero the logits so every downstream op stays finite.
    row = jax.lax.broadcasted_iota(jnp.int32, (tn, 1), 0) + i * tn
    valid = row < n_valid                                       # (TN, 1) bool
    x = jnp.where(valid, x, 0.0)

    # --- stable softmax pieces: single exp pass over the (TN, C) tile ------
    m = jnp.max(x, axis=-1, keepdims=True)                      # (TN, 1)  (XLU)
    e = jnp.exp(x - m)                                          # (TN, C)  (EUP)
    s = jnp.sum(e, axis=-1, keepdims=True)                      # (TN, 1)  (XLU)

    # gather logit / exp at the target class via one-hot compare (no dynamic gather)
    col = jax.lax.broadcasted_iota(jnp.int32, (tn, c), 1)       # (TN, C)
    onehot = col == t                                           # (TN, C) bool
    tgt_logit = jnp.sum(jnp.where(onehot, x, 0.0), axis=-1, keepdims=True)  # (TN, 1)
    tgt_e = jnp.sum(jnp.where(onehot, e, 0.0), axis=-1, keepdims=True)      # (TN, 1)

    # cross entropy, and pt = exp(-ce) reusing `e` (no second exp pass).
    ce = jnp.log(s) + m - tgt_logit                             # (TN, 1)
    # NOTE: pl.reciprocal(s, approx=True) is an option (cheap EUP vrcp), but this
    # divide is per-row (~1/C of the tile's EUP work); keep it exact for tight
    # agreement with the reference.
    pt = tgt_e / s                                              # (TN, 1)

    # focal modulation: (1 - pt)**2 as an explicit square (VPU, avoids pow -> exp/log).
    w = 1.0 - pt
    f_loss = jnp.where(valid, w * w * ce, 0.0)                  # (TN, 1)

    # per-block partial sum -> lane-dense, unmasked (8,128) store.
    partial = jnp.sum(f_loss)
    o_ref[...] = jnp.broadcast_to(partial, (1, 8, 128)).astype(jnp.float32)


def _round_up(x, m):
    return (x + m - 1) // m * m


def _default_tile_n(n, c, budget_bytes=24 * 1024 * 1024, cap=2048):
    """Largest row tile (multiple of 8, <= cap) whose double-buffered inputs fit budget.

    Budget is sized so double-buffered tiles leave headroom under v7x's 64 MiB VMEM;
    v5e/v6e (128 MiB physical) could go larger.
    """
    per_row = 2 * (c * 4 + 4)  # double-buffered f32 logits row + int32 target
    tn = min(cap, max(8, budget_bytes // per_row), _round_up(max(n, 1), 8))
    return max(8, (int(tn) // 8) * 8)


def focal_loss(inputs, targets, *, tn=None):
    """inputs: (N, C) float32 logits; targets: (N,) integer class ids.

    Returns scalar mean focal loss (alpha=None, gamma=2, reduction='mean').
    """
    n, c = inputs.shape
    if tn is None:
        tn = _default_tile_n(n, c)
    tn = max(8, (int(tn) // 8) * 8)

    x = inputs.astype(jnp.float32)
    t = targets.astype(jnp.int32).reshape(n, 1)

    n_rows = n
    if tn > n:
        # Tiny batch: a single partially-filled tile.  Pad rows up to the tile so the
        # block shape never exceeds the array; pad cost is negligible at this size.
        tn = _round_up(n, 8)
        pad = tn - n
        if pad:
            x = jnp.pad(x, ((0, pad), (0, 0)))
            t = jnp.pad(t, ((0, pad), (0, 0)))
        n_rows = tn

    grid = pl.cdiv(n_rows, tn)

    # VMEM limit derived from the (double-buffered) tile, clamped with v7x headroom.
    tile_bytes = tn * c * 4 + tn * 4 + 8 * 128 * 4
    vmem_limit = int(min(max(4 * tile_bytes, 32 * 1024 * 1024), 48 * 1024 * 1024))

    partials = pl.pallas_call(
        functools.partial(_focal_loss_kernel, tn=tn, n_valid=n),
        out_shape=jax.ShapeDtypeStruct((grid, 8, 128), jnp.float32),
        grid=(grid,),
        in_specs=[
            pl.BlockSpec((tn, c), lambda i: (i, 0)),
            pl.BlockSpec((tn, 1), lambda i: (i, 0)),
        ],
        out_specs=pl.BlockSpec((1, 8, 128), lambda i: (i, 0, 0)),
        compiler_params=pltpu.CompilerParams(
            dimension_semantics=("parallel",),
            vmem_limit_bytes=vmem_limit,
        ),
    )(x, t)

    # reduction='mean' over the true (unpadded) batch size; trailing sum is negligible.
    return jnp.sum(partials[:, 0, 0]) / jnp.float32(n)


def focal_loss_ref(inputs, targets):
    """Pure-JAX reference matching the PyTorch module semantics."""
    logp = jax.nn.log_softmax(inputs.astype(jnp.float32), axis=-1)
    ce = -jnp.take_along_axis(logp, targets[:, None].astype(jnp.int32), axis=-1)[:, 0]
    pt = jnp.exp(-ce)
    f_loss = (1.0 - pt) ** GAMMA * ce
    return jnp.mean(f_loss)


if __name__ == "__main__":
    key = jax.random.PRNGKey(0)
    k1, k2, k3, k4 = jax.random.split(key, 4)

    # Case 1: N=200 rows, C=32 classes, tile of 64 rows -> 4-step "parallel" grid with
    # a partially-filled last block handled by in-kernel masking (no wrapper pad).
    N, C = 200, 32
    inputs = jax.random.normal(k1, (N, C), dtype=jnp.float32)
    targets = jax.random.randint(k2, (N,), 0, C, dtype=jnp.int32)

    out = focal_loss(inputs, targets, tn=64)
    out = jax.block_until_ready(out)
    ref = focal_loss_ref(inputs, targets)
    assert jnp.allclose(out, ref, rtol=1e-5, atol=1e-5), (out, ref)

    # Case 2: tiny batch (N=5 < one 8-row tile) exercising the small-batch pad path.
    N2, C2 = 5, 16
    inputs2 = jax.random.normal(k3, (N2, C2), dtype=jnp.float32)
    targets2 = jax.random.randint(k4, (N2,), 0, C2, dtype=jnp.int32)

    out2 = focal_loss(inputs2, targets2)
    out2 = jax.block_until_ready(out2)
    ref2 = focal_loss_ref(inputs2, targets2)
    assert jnp.allclose(out2, ref2, rtol=1e-5, atol=1e-5), (out2, ref2)

    # TODO(synk): per-class `alpha` weighting (weight= in F.cross_entropy) is not
    # implemented since the module default is alpha=None; for very small C (<128) a
    # (C, N)-transposed layout would improve lane utilization but is not needed here.
    print("KERNEL_OK")
</pallas_src>

<mosaic_0001>
module attributes {stable_mosaic.version = 11 : i64} {
  func.func @_focal_loss_kernel(%arg0: i32, %arg1: memref<64x32xf32, #tpu.memory_space<vmem>>, %arg2: memref<64x1xi32, #tpu.memory_space<vmem>>, %arg3: memref<1x8x128xf32, #tpu.memory_space<vmem>>) attributes {dimension_semantics = [#tpu.dimension_semantics<parallel>], iteration_bounds = array<i64: 4>, scalar_prefetch = 0 : i64, scratch_operands = 0 : i64, tpu.core_type = #tpu.core_type<tc>, window_params = [{transform_indices = @transform_0, window_bounds = array<i64: 64, 32>}, {transform_indices = @transform_1, window_bounds = array<i64: 64, 1>}, {transform_indices = @transform_2, window_bounds = array<i64: 1, 8, 128>}]} {
    %c0 = arith.constant 0 : index
    %c0_0 = arith.constant 0 : index
    %0 = vector.load %arg1[%c0, %c0_0] : memref<64x32xf32, #tpu.memory_space<vmem>>, vector<64x32xf32>
    %c0_1 = arith.constant 0 : index
    %c0_2 = arith.constant 0 : index
    %1 = vector.load %arg2[%c0_1, %c0_2] : memref<64x1xi32, #tpu.memory_space<vmem>>, vector<64x1xi32>
    %2 = tpu.iota {dimensions = array<i32: 0>} : vector<64x1xi32>
    %c64_i32 = arith.constant 64 : i32
    %3 = arith.muli %arg0, %c64_i32 : i32
    %4 = vector.broadcast %3 : i32 to vector<64x1xi32>
    %5 = arith.addi %2, %4 : vector<64x1xi32>
    %c200_i32 = arith.constant 200 : i32
    %6 = vector.broadcast %c200_i32 : i32 to vector<64x1xi32>
    %7 = arith.cmpi slt, %5, %6 : vector<64x1xi32>
    %cst = arith.constant 0.000000e+00 : f32
    %8 = vector.shape_cast %7 : vector<64x1xi1> to vector<64x1xi1>
    %9 = vector.broadcast %8 : vector<64x1xi1> to vector<64x32xi1>
    %10 = vector.broadcast %cst : f32 to vector<64x32xf32>
    %11 = arith.select %9, %0, %10 : vector<64x32xi1>, vector<64x32xf32>
    %cst_3 = arith.constant dense<0xFF800000> : vector<64xf32>
    %12 = vector.multi_reduction <maximumf>, %11, %cst_3 [1] : vector<64x32xf32> to vector<64xf32>
    %13 = vector.shape_cast %12 : vector<64xf32> to vector<64x1xf32>
    %14 = vector.broadcast %13 : vector<64x1xf32> to vector<64x32xf32>
    %15 = arith.subf %11, %14 : vector<64x32xf32>
    %16 = math.exp %15 : vector<64x32xf32>
    %cst_4 = arith.constant dense<0.000000e+00> : vector<64xf32>
    %17 = vector.multi_reduction <add>, %16, %cst_4 [1] : vector<64x32xf32> to vector<64xf32>
    %18 = vector.shape_cast %17 : vector<64xf32> to vector<64x1xf32>
    %19 = tpu.iota {dimensions = array<i32: 1>} : vector<64x32xi32>
    %20 = vector.broadcast %1 : vector<64x1xi32> to vector<64x32xi32>
    %21 = arith.cmpi eq, %19, %20 : vector<64x32xi32>
    %cst_5 = arith.constant 0.000000e+00 : f32
    %22 = vector.broadcast %cst_5 : f32 to vector<64x32xf32>
    %23 = arith.select %21, %11, %22 : vector<64x32xi1>, vector<64x32xf32>
    %cst_6 = arith.constant dense<0.000000e+00> : vector<64xf32>
    %24 = vector.multi_reduction <add>, %23, %cst_6 [1] : vector<64x32xf32> to vector<64xf32>
    %25 = vector.shape_cast %24 : vector<64xf32> to vector<64x1xf32>
    %cst_7 = arith.constant 0.000000e+00 : f32
    %26 = vector.broadcast %cst_7 : f32 to vector<64x32xf32>
    %27 = arith.select %21, %16, %26 : vector<64x32xi1>, vector<64x32xf32>
    %cst_8 = arith.constant dense<0.000000e+00> : vector<64xf32>
    %28 = vector.multi_reduction <add>, %27, %cst_8 [1] : vector<64x32xf32> to vector<64xf32>
    %29 = vector.shape_cast %28 : vector<64xf32> to vector<64x1xf32>
    %30 = math.log %18 : vector<64x1xf32>
    %31 = arith.addf %30, %13 : vector<64x1xf32>
    %32 = arith.subf %31, %25 : vector<64x1xf32>
    %33 = arith.divf %29, %18 : vector<64x1xf32>
    %cst_9 = arith.constant 1.000000e+00 : f32
    %34 = vector.broadcast %cst_9 : f32 to vector<64x1xf32>
    %35 = arith.subf %34, %33 : vector<64x1xf32>
    %36 = arith.mulf %35, %35 : vector<64x1xf32>
    %37 = arith.mulf %36, %32 : vector<64x1xf32>
    %cst_10 = arith.constant 0.000000e+00 : f32
    %38 = vector.broadcast %cst_10 : f32 to vector<64x1xf32>
    %39 = arith.select %7, %37, %38 : vector<64x1xi1>, vector<64x1xf32>
    %40 = vector.shape_cast %39 : vector<64x1xf32> to vector<1x64x1xf32>
    %cst_11 = arith.constant dense<0.000000e+00> : vector<1xf32>
    %41 = vector.multi_reduction <add>, %40, %cst_11 [1, 2] : vector<1x64x1xf32> to vector<1xf32>
    %42 = vector.shape_cast %41 : vector<1xf32> to vector<1x1x1xf32>
    %43 = vector.extract %42[0, 0, 0] : f32 from vector<1x1x1xf32>
    %44 = vector.broadcast %43 : f32 to vector<1x8x128xf32>
    %c0_12 = arith.constant 0 : index
    %c0_13 = arith.constant 0 : index
    %c0_14 = arith.constant 0 : index
    %45 = vector.load %arg3[%c0_12, %c0_13, %c0_14] : memref<1x8x128xf32, #tpu.memory_space<vmem>>, vector<1x8x128xf32>
    tpu.vector_store %arg3[%c0_12, %c0_13, %c0_14], %44 {strides = array<i32>} : memref<1x8x128xf32, #tpu.memory_space<vmem>>, vector<1x8x128xf32>,
    return
  }
  func.func @transform_0(%arg0: i32) -> (i32, i32) {
    %c0_i32 = arith.constant 0 : i32
    %c0_i32_0 = arith.constant 0 : i32
    return %arg0, %c0_i32 : i32, i32
  }
  func.func @transform_1(%arg0: i32) -> (i32, i32) {
    %c0_i32 = arith.constant 0 : i32
    %c0_i32_0 = arith.constant 0 : i32
    return %arg0, %c0_i32 : i32, i32
  }
  func.func @transform_2(%arg0: i32) -> (i32, i32, i32) {
    %c0_i32 = arith.constant 0 : i32
    %c0_i32_0 = arith.constant 0 : i32
    %c0_i32_1 = arith.constant 0 : i32
    return %arg0, %c0_i32, %c0_i32_0 : i32, i32, i32
  }
}

</mosaic_0001>

<llo_original>
// kernel: tpu_custom_call.1
$region0: #{tpu_custom_call.1}
  #allocation0 [shape = 'u32[]', space=smem, size = 0x4, offset = 0x4, fixed_abs, tag = 'smem constant byte address 0x4 - core index']
  #allocation1 [shape = 'u32[72,128]{1,0:T(1,128)}', space=vmem, size = 0x9000, scoped, tag = 'internal scratch']
  %s0 = inlined_call_operand.vmem [shape: f32[200,32], index: 0, kind: input, shape index: {}]
  %s1 = inlined_call_operand.vmem [shape: s32[200,1], index: 1, kind: input, shape index: {}]
  %s2 = inlined_call_operand.hbm [shape: f32[4,8,128], index: 2, kind: output, shape index: {}]
  %s3 = sld [smem:[#allocation0]]
  $region41: #{tpu_custom_call.1} parent=0
    _
  %s5 = ssub.s32 1, %s3
  %s6 = scalar_select 0, %s5, %s3
  $region1: #{tpu_custom_call.1} parent=0
    #allocation2 [shape = 'u8[8192]{0}', space=vmem, size = 0x2000, scoped, tag = 'output window, operand 0']
    #allocation3 [shape = 's32[2]{0}', space=sflag, size = 0x8, scoped, tag = 'scoped memory for tpu_custom_call.1']
    %7 = vsyncpa [#allocation3], 0
    %s8 = scalar_lea.sflag [#allocation3], 1
    %9 = vsyncpa %s8, 0
    loop: start=0, step=1, limit=6
    $region2: #{tpu_custom_call.1} parent=1 // loop_pre_header
      _
    $region3: #{tpu_custom_call.1} parent=1 // loop_header
      %s11 = sphi 0, %s15
      %p12 = scmp.ge.s32.totalorder %s11, 6
      %s21 = sphi 0, %s23
      %s24 = sphi 0, %s21
      %s25 = sphi 0, %s24
      %s41 = sphi 0, %s25
      %s47 = sphi 0, %s49
      %s50 = sphi 0, %s47
      %s51 = sphi 0, %s50
      %s67 = sphi 0, %s51
      %s73 = sphi 0, %s75
      %s76 = sphi 0, %s73
      %s77 = sphi 0, %s76
      %s93 = sphi 0, %s77
    $region4: #{tpu_custom_call.1} parent=1 // loop_header_branch
      %14 = sbr.rel (%p12) target = $region8
    $region5: #{tpu_custom_call.1} parent=1 // loop_body
      %s16 = ssub.s32 %s11, 1
      %s17 = ssub.s32 %s11, 2
      %s18 = sadd.s32 %s11, 1
      %s19 = ssub.s32 %s11, %s18
      %p20 = scmp.eq.s32.totalorder %s19, 0
      %s22 = sadd.s32 %s21, 1
      %s23 = scalar_select %p20, %s21, %s22
      %p26 = pneg %p20
      %p27 = scmp.eq.s32.totalorder %s11, 3
      %p28 = por %p26, %p27
      %p29 = scmp.ne.s32.totalorder %s21, %s24
      %p30 = scmp.eq.s32.totalorder %s11, 0
      %p31 = por %p29, %p30
      %p32 = scmp.ne.s32.totalorder %s21, %s24
      %p33 = scmp.eq.s32.totalorder %s16, 3
      %p34 = por %p32, %p33
      %p35 = scmp.ne.s32.totalorder %s24, %s25
      %p36 = scmp.eq.s32.totalorder %s16, 0
      %p37 = por %p35, %p36
      %p38 = scmp.ne.s32.totalorder %s24, %s25
      %p39 = scmp.eq.s32.totalorder %s17, 3
      %p40 = por %p38, %p39
      %p42 = scmp.ne.s32.totalorder %s25, %s41
      %p43 = scmp.eq.s32.totalorder %s17, 0
      %p44 = por %p42, %p43
      %s45 = ssub.s32 %s11, %s18
      %p46 = scmp.eq.s32.totalorder %s45, 0
      %s48 = sadd.s32 %s47, 1
      %s49 = scalar_select %p46, %s47, %s48
      %p52 = pneg %p46
      %p53 = scmp.eq.s32.totalorder %s11, 3
      %p54 = por %p52, %p53
      %p55 = scmp.ne.s32.totalorder %s47, %s50
      %p56 = scmp.eq.s32.totalorder %s11, 0
      %p57 = por %p55, %p56
      %p58 = scmp.ne.s32.totalorder %s47, %s50
      %p59 = scmp.eq.s32.totalorder %s16, 3
      %p60 = por %p58, %p59
      %p61 = scmp.ne.s32.totalorder %s50, %s51
      %p62 = scmp.eq.s32.totalorder %s16, 0
      %p63 = por %p61, %p62
      %p64 = scmp.ne.s32.totalorder %s50, %s51
      %p65 = scmp.eq.s32.totalorder %s17, 3
      %p66 = por %p64, %p65
      %p68 = scmp.ne.s32.totalorder %s51, %s67
      %p69 = scmp.eq.s32.totalorder %s17, 0
      %p70 = por %p68, %p69
      %s71 = ssub.s32 %s11, %s18
      %p72 = scmp.eq.s32.totalorder %s71, 0
      %s74 = sadd.s32 %s73, 1
      %s75 = scalar_select %p72, %s73, %s74
      %p78 = pneg %p72
      %p79 = scmp.eq.s32.totalorder %s11, 3
      %p80 = por %p78, %p79
      %p81 = scmp.ne.s32.totalorder %s73, %s76
      %p82 = scmp.eq.s32.totalorder %s11, 0
      %p83 = por %p81, %p82
      %p84 = scmp.ne.s32.totalorder %s73, %s76
      %p85 = scmp.eq.s32.totalorder %s16, 3
      %p86 = por %p84, %p85
      %p87 = scmp.ne.s32.totalorder %s76, %s77
      %p88 = scmp.eq.s32.totalorder %s16, 0
      %p89 = por %p87, %p88
      %p90 = scmp.ne.s32.totalorder %s76, %s77
      %p91 = scmp.eq.s32.totalorder %s17, 3
      %p92 = por %p90, %p91
      %p94 = scmp.ne.s32.totalorder %s77, %s93
      %p95 = scmp.eq.s32.totalorder %s17, 0
      %p96 = por %p94, %p95
      %p97 = scmp.le.s32.totalorder 1, %s11
      %p98 = scmp.lt.s32.totalorder %s11, 5
      %p99 = pnand %p97, %p98
      %p100 = pneg %p99
      // Predicated region
      $region9: #{tpu_custom_call.1} parent=5 // pred_check
        _
      $region10: #{tpu_custom_call.1} parent=5 // pred_check_branch
        %102 = sbr.rel (%p99) target = $region12
      $region11: #{tpu_custom_call.1} parent=5 // pred_region
        %s103 = ssub.s32 %s11, 1
      $region12: #{tpu_custom_call.1} parent=5 // pred_fallthru
        _
      %p104 = scmp.lt.s32.totalorder %s11, 4
      // Predicated region
      $region13: #{tpu_custom_call.1} parent=5 // pred_check
        %p105 = pneg %p104
      $region14: #{tpu_custom_call.1} parent=5 // pred_check_branch
        %107 = sbr.rel (%p105) target = $region16
      $region15: #{tpu_custom_call.1} parent=5 // pred_region
        // Predicated region
        $region17: #{tpu_custom_call.1} parent=15 // pred_check
          %p108 = pneg %p31
        $region18: #{tpu_custom_call.1} parent=15 // pred_check_branch
          %110 = sbr.rel (%p108) target = $region20
        $region19: #{tpu_custom_call.1} parent=15 // pred_region
          %s111 = smul.u32 8, %s11
          %s112 = ssub.s32 25, %s111
          %p113 = scmp.lt.s32.totalorder %s112, 8
          %s114 = scalar_select %p113, %s112, 8
          %s115 = smul.u32 8, %s114
          %p116 = scmp.lt.s32.totalorder %s111, 24
          %s117 = scalar_select %p116, %s111, 24
          %s118 = smul.addr %s117, 8
          %s119 = scalar_lea.vmem %s0, %s118
          %s120 = smul.u32 8, %s11
          %s121 = ssub.s32 25, %s120
          %p122 = scmp.lt.s32.totalorder %s121, 8
          %s123 = scalar_select %p122, %s121, 8
          %s124 = smul.u32 8, %s123
        $region20: #{tpu_custom_call.1} parent=15 // pred_fallthru
          _
        // Predicated region
        $region21: #{tpu_custom_call.1} parent=15 // pred_check
          %p125 = pneg %p57
        $region22: #{tpu_custom_call.1} parent=15 // pred_check_branch
          %127 = sbr.rel (%p125) target = $region24
        $region23: #{tpu_custom_call.1} parent=15 // pred_region
          %s128 = smul.u32 8, %s11
          %s129 = ssub.s32 25, %s128
          %p130 = scmp.lt.s32.totalorder %s129, 8
          %s131 = scalar_select %p130, %s129, 8
          %s132 = smul.u32 8, %s131
          %p133 = scmp.lt.s32.totalorder %s128, 24
          %s134 = scalar_select %p133, %s128, 24
          %s135 = smul.addr %s134, 8
          %s136 = scalar_lea.vmem %s1, %s135
          %s137 = smul.u32 8, %s11
          %s138 = ssub.s32 25, %s137
          %p139 = scmp.lt.s32.totalorder %s138, 8
          %s140 = scalar_select %p139, %s138, 8
          %s141 = smul.u32 8, %s140
        $region24: #{tpu_custom_call.1} parent=15 // pred_fallthru
          _
      $region16: #{tpu_custom_call.1} parent=5 // pred_fallthru
        _
      %p142 = scmp.le.s32.totalorder 1, %s11
      %p143 = scmp.lt.s32.totalorder %s11, 5
      %p144 = pnand %p142, %p143
      %p145 = pneg %p144
      // Predicated region
      $region25: #{tpu_custom_call.1} parent=5 // pred_check
        _
      $region26: #{tpu_custom_call.1} parent=5 // pred_check_branch
        %147 = sbr.rel (%p144) target = $region28
      $region27: #{tpu_custom_call.1} parent=5 // pred_region
        %s148 = ssub.s32 %s11, 1
        %s149 = smul.u32 8, %s16
        %s150 = ssub.s32 25, %s149
        %p151 = scmp.lt.s32.totalorder %s150, 8
        %s152 = scalar_select %p151, %s150, 8
        %s153 = smul.u32 8, %s152
        %p154 = scmp.lt.s32.totalorder %s149, 24
        %s155 = scalar_select %p154, %s149, 24
        %s156 = smul.addr %s155, 8
        %s157 = scalar_lea.vmem %s0, %s156
        %p158 = pneg %p37
        %p159 = pneg %p34
        %s160 = smul.u32 8, %s16
        %s161 = ssub.s32 25, %s160
        %p162 = scmp.lt.s32.totalorder %s161, 8
        %s163 = scalar_select %p162, %s161, 8
        %s164 = smul.u32 8, %s163
        %p165 = scmp.lt.s32.totalorder %s160, 24
        %s166 = scalar_select %p165, %s160, 24
        %s167 = smul.addr %s166, 8
        %s168 = scalar_lea.vmem %s1, %s167
        %p169 = pneg %p63
        %p170 = pneg %p60
        %p171 = pneg %p89
        %p172 = pneg %p86
        %s173 = sand.u32 %s76, 1
        %s174 = scalar_lea.sflag [#allocation3], %s173
        %s175 = sand.u32 %s76, 1
        %s176 = smul.addr %s175, 8
        %s177 = scalar_lea.vmem [#allocation2], %s176
        %s178 = smul.u32 8, %s16
        %s179 = ssub.s32 25, %s178
        %p180 = scmp.lt.s32.totalorder %s179, 8
        %s181 = scalar_select %p180, %s179, 8
        %s182 = smul.u32 8, %s181
        %p183 = scmp.lt.s32.totalorder %s178, 24
        %s184 = scalar_select %p183, %s178, 24
        %s185 = smul.addr %s184, 8
        %s186 = scalar_lea.vmem %s0, %s185
        %s187 = smul.u32 8, %s16
        %s188 = ssub.s32 25, %s187
        %p189 = scmp.lt.s32.totalorder %s188, 8
        %s190 = scalar_select %p189, %s188, 8
        %s191 = smul.u32 8, %s190
        %s192 = smul.u32 8, %s16
        %s193 = ssub.s32 25, %s192
        %p194 = scmp.lt.s32.totalorder %s193, 8
        %s195 = scalar_select %p194, %s193, 8
        %s196 = smul.u32 8, %s195
        %p197 = scmp.lt.s32.totalorder %s192, 24
        %s198 = scalar_select %p197, %s192, 24
        %s199 = smul.addr %s198, 8
        %s200 = scalar_lea.vmem %s1, %s199
        %s201 = smul.u32 8, %s16
        %s202 = ssub.s32 25, %s201
        %p203 = scmp.lt.s32.totalorder %s202, 8
        %s204 = scalar_select %p203, %s202, 8
        %s205 = smul.u32 8, %s204
        %v206 = vld [vmem:[%s186] sm:$0xff]
        %v207 = vld [vmem:[%s186 + $0x8] sm:$0xff]
        %v208 = vld [vmem:[%s186 + $0x10] sm:$0xff]
        %v209 = vld [vmem:[%s186 + $0x18] sm:$0xff]
        %v210 = vld [vmem:[%s186 + $0x20] sm:$0xff]
        %v211 = vld [vmem:[%s186 + $0x28] sm:$0xff]
        %v212 = vld [vmem:[%s186 + $0x30] sm:$0xff]
        %v213 = vld [vmem:[%s186 + $0x38] sm:$0xff]
        %v214 = vld [vmem:[%s200] sm:$0xff]
        %v215 = vld [vmem:[%s200 + $0x8] sm:$0xff]
        %v216 = vld [vmem:[%s200 + $0x10] sm:$0xff]
        %v217 = vld [vmem:[%s200 + $0x18] sm:$0xff]
        %v218 = vld [vmem:[%s200 + $0x20] sm:$0xff]
        %v219 = vld [vmem:[%s200 + $0x28] sm:$0xff]
        %v220 = vld [vmem:[%s200 + $0x30] sm:$0xff]
        %v221 = vld [vmem:[%s200 + $0x38] sm:$0xff]
        %v222 = vlaneseq
        %v223 = vshrl.u32 %v222, 7
        %v224 = vadd.s32 %v223, 8
        %v225 = vadd.s32 %v223, 16
        %v226 = vadd.s32 %v223, 24
        %v227 = vadd.s32 %v223, 32
        %v228 = vadd.s32 %v223, 40
        %v229 = vadd.s32 %v223, 48
        %v230 = vadd.s32 %v223, 56
        %s231 = smul.u32 %s16, 64
        %v232 = vstv %s231
        %v233 = vadd.s32 %v223, %v232
        %v234 = vadd.s32 %v224, %v232
        %v235 = vadd.s32 %v225, %v232
        %v236 = vadd.s32 %v226, %v232
        %v237 = vadd.s32 %v227, %v232
        %v238 = vadd.s32 %v228, %v232
        %v239 = vadd.s32 %v229, %v232
        %v240 = vadd.s32 %v230, %v232
        %vm241 = vcmp.lt.s32.totalorder %v233, 200
        %vm242 = vcmp.lt.s32.totalorder %v234, 200
        %vm243 = vcmp.lt.s32.totalorder %v235, 200
        %vm244 = vcmp.lt.s32.totalorder %v236, 200
        %vm245 = vcmp.lt.s32.totalorder %v237, 200
        %vm246 = vcmp.lt.s32.totalorder %v238, 200
        %vm247 = vcmp.lt.s32.totalorder %v239, 200
        %vm248 = vcmp.lt.s32.totalorder %v240, 200
        %v249 = vsel %vm241, 1, 0
        %v250 = vsel %vm242, 1, 0
        %v251 = vsel %vm243, 1, 0
        %v252 = vsel %vm244, 1, 0
        %v253 = vsel %vm245, 1, 0
        %v254 = vsel %vm246, 1, 0
        %v255 = vsel %vm247, 1, 0
        %v256 = vsel %vm248, 1, 0
        %vm257 = vcmp.eq.s32.totalorder %v249, 1
        %vm258 = vcmp.eq.s32.totalorder %v250, 1
        %vm259 = vcmp.eq.s32.totalorder %v251, 1
        %vm260 = vcmp.eq.s32.totalorder %v252, 1
        %vm261 = vcmp.eq.s32.totalorder %v253, 1
        %vm262 = vcmp.eq.s32.totalorder %v254, 1
        %vm263 = vcmp.eq.s32.totalorder %v255, 1
        %vm264 = vcmp.eq.s32.totalorder %v256, 1
        %v265 = vsel %vm257, %v206, 0.0
        %v266 = vsel %vm258, %v207, 0.0
        %v267 = vsel %vm259, %v208, 0.0
        %v268 = vsel %vm260, %v209, 0.0
        %v269 = vsel %vm261, %v210, 0.0
        %v270 = vsel %vm262, %v211, 0.0
        %v271 = vsel %vm263, %v212, 0.0
        %v272 = vsel %vm264, %v213, 0.0
        %vm273 = vcmask 261120
        %v274 = vsel %vm273, %v265, -inf
        %275 = vmax.xlane.f32.xlu0 %v274
        %v276 = vpop.xlane.xlu0 %275
        %v277 = vsel %vm273, %v266, -inf
        %278 = vmax.xlane.f32.xlu0 %v277
        %v279 = vpop.xlane.xlu0 %278
        %v280 = vsel %vm273, %v267, -inf
        %281 = vmax.xlane.f32.xlu0 %v280
        %v282 = vpop.xlane.xlu0 %281
        %v283 = vsel %vm273, %v268, -inf
        %284 = vmax.xlane.f32.xlu0 %v283
        %v285 = vpop.xlane.xlu0 %284
        %v286 = vsel %vm273, %v269, -inf
        %287 = vmax.xlane.f32.xlu0 %v286
        %v288 = vpop.xlane.xlu0 %287
        %v289 = vsel %vm273, %v270, -inf
        %290 = vmax.xlane.f32.xlu0 %v289
        %v291 = vpop.xlane.xlu0 %290
        %v292 = vsel %vm273, %v271, -inf
        %293 = vmax.xlane.f32.xlu0 %v292
        %v294 = vpop.xlane.xlu0 %293
        %v295 = vsel %vm273, %v272, -inf
        %296 = vmax.xlane.f32.xlu0 %v295
        %v297 = vpop.xlane.xlu0 %296
        %v298 = vsub.f32 %v265, %v276
        %v299 = vsub.f32 %v266, %v279
        %v300 = vsub.f32 %v267, %v282
        %v301 = vsub.f32 %v268, %v285
        %v302 = vsub.f32 %v269, %v288
        %v303 = vsub.f32 %v270, %v291
        %v304 = vsub.f32 %v271, %v294
        %v305 = vsub.f32 %v272, %v297
        %v306 = vmul.f32 %v298, 1.442695
        %v307 = vpow.pop %v306
        %v308 = vmul.f32 %v299, 1.442695
        %v309 = vpow.pop %v308
        %v310 = vmul.f32 %v300, 1.442695
        %v311 = vpow.pop %v310
        %v312 = vmul.f32 %v301, 1.442695
        %v313 = vpow.pop %v312
        %v314 = vmul.f32 %v302, 1.442695
        %v315 = vpow.pop %v314
        %v316 = vmul.f32 %v303, 1.442695
        %v317 = vpow.pop %v316
        %v318 = vmul.f32 %v304, 1.442695
        %v319 = vpow.pop %v318
        %v320 = vmul.f32 %v305, 1.442695
        %v321 = vpow.pop %v320
        %v322 = vsel %vm273, %v307, 0.0
        %323 = vadd.xlane.f32.xlu0 %v322
        %v324 = vpop.xlane.xlu0 %323
        %v325 = vsel %vm273, %v309, 0.0
        %326 = vadd.xlane.f32.xlu0 %v325
        %v327 = vpop.xlane.xlu0 %326
        %v328 = vsel %vm273, %v311, 0.0
        %329 = vadd.xlane.f32.xlu0 %v328
        %v330 = vpop.xlane.xlu0 %329
        %v331 = vsel %vm273, %v313, 0.0
        %332 = vadd.xlane.f32.xlu0 %v331
        %v333 = vpop.xlane.xlu0 %332
        %v334 = vsel %vm273, %v315, 0.0
        %335 = vadd.xlane.f32.xlu0 %v334
        %v336 = vpop.xlane.xlu0 %335
        %v337 = vsel %vm273, %v317, 0.0
        %338 = vadd.xlane.f32.xlu0 %v337
        %v339 = vpop.xlane.xlu0 %338
        %v340 = vsel %vm273, %v319, 0.0
        %341 = vadd.xlane.f32.xlu0 %v340
        %v342 = vpop.xlane.xlu0 %341
        %v343 = vsel %vm273, %v321, 0.0
        %344 = vadd.xlane.f32.xlu0 %v343
        %v345 = vpop.xlane.xlu0 %344
        %v346 = vlaneseq
        %v347 = vand.u32 %v346, 127
        %348 = vset.pattern.permute.xlu0 0
        %349 = vperm.xlu0 %348, %v214
        %v350 = vpop.permute.xlu0 %349
        %351 = vset.pattern.permute.xlu0 0
        %352 = vperm.xlu0 %351, %v215
        %v353 = vpop.permute.xlu0 %352
        %354 = vset.pattern.permute.xlu0 0
        %355 = vperm.xlu0 %354, %v216
        %v356 = vpop.permute.xlu0 %355
        %357 = vset.pattern.permute.xlu0 0
        %358 = vperm.xlu0 %357, %v217
        %v359 = vpop.permute.xlu0 %358
        %360 = vset.pattern.permute.xlu0 0
        %361 = vperm.xlu0 %360, %v218
        %v362 = vpop.permute.xlu0 %361
        %363 = vset.pattern.permute.xlu0 0
        %364 = vperm.xlu0 %363, %v219
        %v365 = vpop.permute.xlu0 %364
        %366 = vset.pattern.permute.xlu0 0
        %367 = vperm.xlu0 %366, %v220
        %v368 = vpop.permute.xlu0 %367
        %369 = vset.pattern.permute.xlu0 0
        %370 = vperm.xlu0 %369, %v221
        %v371 = vpop.permute.xlu0 %370
        %vm372 = vcmp.eq.s32.totalorder %v347, %v350
        %vm373 = vcmp.eq.s32.totalorder %v347, %v353
        %vm374 = vcmp.eq.s32.totalorder %v347, %v356
        %vm375 = vcmp.eq.s32.totalorder %v347, %v359
        %vm376 = vcmp.eq.s32.totalorder %v347, %v362
        %vm377 = vcmp.eq.s32.totalorder %v347, %v365
        %vm378 = vcmp.eq.s32.totalorder %v347, %v368
        %vm379 = vcmp.eq.s32.totalorder %v347, %v371
        %v380 = vsel %vm372, %v265, 0.0
        %v381 = vsel %vm373, %v266, 0.0
        %v382 = vsel %vm374, %v267, 0.0
        %v383 = vsel %vm375, %v268, 0.0
        %v384 = vsel %vm376, %v269, 0.0
        %v385 = vsel %vm377, %v270, 0.0
        %v386 = vsel %vm378, %v271, 0.0
        %v387 = vsel %vm379, %v272, 0.0
        %v388 = vsel %vm273, %v380, 0.0
        %389 = vadd.xlane.f32.xlu0 %v388
        %v390 = vpop.xlane.xlu0 %389
        %v391 = vsel %vm273, %v381, 0.0
        %392 = vadd.xlane.f32.xlu0 %v391
        %v393 = vpop.xlane.xlu0 %392
        %v394 = vsel %vm273, %v382, 0.0
        %395 = vadd.xlane.f32.xlu0 %v394
        %v396 = vpop.xlane.xlu0 %395
        %v397 = vsel %vm273, %v383, 0.0
        %398 = vadd.xlane.f32.xlu0 %v397
        %v399 = vpop.xlane.xlu0 %398
        %v400 = vsel %vm273, %v384, 0.0
        %401 = vadd.xlane.f32.xlu0 %v400
        %v402 = vpop.xlane.xlu0 %401
        %v403 = vsel %vm273, %v385, 0.0
        %404 = vadd.xlane.f32.xlu0 %v403
        %v405 = vpop.xlane.xlu0 %404
        %v406 = vsel %vm273, %v386, 0.0
        %407 = vadd.xlane.f32.xlu0 %v406
        %v408 = vpop.xlane.xlu0 %407
        %v409 = vsel %vm273, %v387, 0.0
        %410 = vadd.xlane.f32.xlu0 %v409
        %v411 = vpop.xlane.xlu0 %410
        %v412 = vsel %vm372, %v307, 0.0
        %v413 = vsel %vm373, %v309, 0.0
        %v414 = vsel %vm374, %v311, 0.0
        %v415 = vsel %vm375, %v313, 0.0
        %v416 = vsel %vm376, %v315, 0.0
        %v417 = vsel %vm377, %v317, 0.0
        %v418 = vsel %vm378, %v319, 0.0
        %v419 = vsel %vm379, %v321, 0.0
        %v420 = vsel %vm273, %v412, 0.0
        %421 = vadd.xlane.f32.xlu0 %v420
        %v422 = vpop.xlane.xlu0 %421
        %v423 = vsel %vm273, %v413, 0.0
        %424 = vadd.xlane.f32.xlu0 %v423
        %v425 = vpop.xlane.xlu0 %424
        %v426 = vsel %vm273, %v414, 0.0
        %427 = vadd.xlane.f32.xlu0 %v426
        %v428 = vpop.xlane.xlu0 %427
        %v429 = vsel %vm273, %v415, 0.0
        %430 = vadd.xlane.f32.xlu0 %v429
        %v431 = vpop.xlane.xlu0 %430
        %v432 = vsel %vm273, %v416, 0.0
        %433 = vadd.xlane.f32.xlu0 %v432
        %v434 = vpop.xlane.xlu0 %433
        %v435 = vsel %vm273, %v417, 0.0
        %436 = vadd.xlane.f32.xlu0 %v435
        %v437 = vpop.xlane.xlu0 %436
        %v438 = vsel %vm273, %v418, 0.0
        %439 = vadd.xlane.f32.xlu0 %v438
        %v440 = vpop.xlane.xlu0 %439
        %v441 = vsel %vm273, %v419, 0.0
        %442 = vadd.xlane.f32.xlu0 %v441
        %v443 = vpop.xlane.xlu0 %442
        %v444 = vlog2.pop %v324
        %v445 = vmul.f32 %v444, 0.6931472
        %v446 = vlog2.pop %v327
        %v447 = vmul.f32 %v446, 0.6931472
        %v448 = vlog2.pop %v330
        %v449 = vmul.f32 %v448, 0.6931472
        %v450 = vlog2.pop %v333
        %v451 = vmul.f32 %v450, 0.6931472
        %v452 = vlog2.pop %v336
        %v453 = vmul.f32 %v452, 0.6931472
        %v454 = vlog2.pop %v339
        %v455 = vmul.f32 %v454, 0.6931472
        %v456 = vlog2.pop %v342
        %v457 = vmul.f32 %v456, 0.6931472
        %v458 = vlog2.pop %v345
        %v459 = vmul.f32 %v458, 0.6931472
        %v460 = vadd.f32 %v445, %v276
        %v461 = vadd.f32 %v447, %v279
        %v462 = vadd.f32 %v449, %v282
        %v463 = vadd.f32 %v451, %v285
        %v464 = vadd.f32 %v453, %v288
        %v465 = vadd.f32 %v455, %v291
        %v466 = vadd.f32 %v457, %v294
        %v467 = vadd.f32 %v459, %v297
        %v468 = vsub.f32 %v460, %v390
        %v469 = vsub.f32 %v461, %v393
        %v470 = vsub.f32 %v462, %v396
        %v471 = vsub.f32 %v463, %v399
        %v472 = vsub.f32 %v464, %v402
        %v473 = vsub.f32 %v465, %v405
        %v474 = vsub.f32 %v466, %v408
        %v475 = vsub.f32 %v467, %v411
        %v476 = vrcp.pop %v324
        %v477 = vmul.f32 %v324, %v476
        %v478 = vsub.f32 1.0, %v477
        %v479 = vmul.f32 %v476, %v478
        %v480 = vadd.f32 %v476, %v479
        %vm481 = vweird.f32 %v324
        %vm482 = vweird.f32 %v476
        %vm483 = vmor %vm481, %vm482
        %v484 = vsel %vm483, %v476, %v480
        %v485 = vand.u32 2147483647, %v324
        %vm486 = vcmp.eq.f32.partialorder %v485, 8.507059e+37
        %v487 = vand.u32 %v324, 2147483648
        %v488 = vor.u32 1.1754944e-38, %v487
        %v489 = vsel %vm486, %v488, %v484
        %v490 = vmul.f32 %v422, %v489
        %v491 = vrcp.pop %v327
        %v492 = vmul.f32 %v327, %v491
        %v493 = vsub.f32 1.0, %v492
        %v494 = vmul.f32 %v491, %v493
        %v495 = vadd.f32 %v491, %v494
        %vm496 = vweird.f32 %v327
        %vm497 = vweird.f32 %v491
        %vm498 = vmor %vm496, %vm497
        %v499 = vsel %vm498, %v491, %v495
        %v500 = vand.u32 2147483647, %v327
        %vm501 = vcmp.eq.f32.partialorder %v500, 8.507059e+37
        %v502 = vand.u32 %v327, 2147483648
        %v503 = vor.u32 1.1754944e-38, %v502
        %v504 = vsel %vm501, %v503, %v499
        %v505 = vmul.f32 %v425, %v504
        %v506 = vrcp.pop %v330
        %v507 = vmul.f32 %v330, %v506
        %v508 = vsub.f32 1.0, %v507
        %v509 = vmul.f32 %v506, %v508
        %v510 = vadd.f32 %v506, %v509
        %vm511 = vweird.f32 %v330
        %vm512 = vweird.f32 %v506
        %vm513 = vmor %vm511, %vm512
        %v514 = vsel %vm513, %v506, %v510
        %v515 = vand.u32 2147483647, %v330
        %vm516 = vcmp.eq.f32.partialorder %v515, 8.507059e+37
        %v517 = vand.u32 %v330, 2147483648
        %v518 = vor.u32 1.1754944e-38, %v517
        %v519 = vsel %vm516, %v518, %v514
        %v520 = vmul.f32 %v428, %v519
        %v521 = vrcp.pop %v333
        %v522 = vmul.f32 %v333, %v521
        %v523 = vsub.f32 1.0, %v522
        %v524 = vmul.f32 %v521, %v523
        %v525 = vadd.f32 %v521, %v524
        %vm526 = vweird.f32 %v333
        %vm527 = vweird.f32 %v521
        %vm528 = vmor %vm526, %vm527
        %v529 = vsel %vm528, %v521, %v525
        %v530 = vand.u32 2147483647, %v333
        %vm531 = vcmp.eq.f32.partialorder %v530, 8.507059e+37
        %v532 = vand.u32 %v333, 2147483648
        %v533 = vor.u32 1.1754944e-38, %v532
        %v534 = vsel %vm531, %v533, %v529
        %v535 = vmul.f32 %v431, %v534
        %v536 = vrcp.pop %v336
        %v537 = vmul.f32 %v336, %v536
        %v538 = vsub.f32 1.0, %v537
        %v539 = vmul.f32 %v536, %v538
        %v540 = vadd.f32 %v536, %v539
        %vm541 = vweird.f32 %v336
        %vm542 = vweird.f32 %v536
        %vm543 = vmor %vm541, %vm542
        %v544 = vsel %vm543, %v536, %v540
        %v545 = vand.u32 2147483647, %v336
        %vm546 = vcmp.eq.f32.partialorder %v545, 8.507059e+37
        %v547 = vand.u32 %v336, 2147483648
        %v548 = vor.u32 1.1754944e-38, %v547
        %v549 = vsel %vm546, %v548, %v544
        %v550 = vmul.f32 %v434, %v549
        %v551 = vrcp.pop %v339
        %v552 = vmul.f32 %v339, %v551
        %v553 = vsub.f32 1.0, %v552
        %v554 = vmul.f32 %v551, %v553
        %v555 = vadd.f32 %v551, %v554
        %vm556 = vweird.f32 %v339
        %vm557 = vweird.f32 %v551
        %vm558 = vmor %vm556, %vm557
        %v559 = vsel %vm558, %v551, %v555
        %v560 = vand.u32 2147483647, %v339
        %vm561 = vcmp.eq.f32.partialorder %v560, 8.507059e+37
        %v562 = vand.u32 %v339, 2147483648
        %v563 = vor.u32 1.1754944e-38, %v562
        %v564 = vsel %vm561, %v563, %v559
        %v565 = vmul.f32 %v437, %v564
        %v566 = vrcp.pop %v342
        %v567 = vmul.f32 %v342, %v566
        %v568 = vsub.f32 1.0, %v567
        %v569 = vmul.f32 %v566, %v568
        %v570 = vadd.f32 %v566, %v569
        %vm571 = vweird.f32 %v342
        %vm572 = vweird.f32 %v566
        %vm573 = vmor %vm571, %vm572
        %v574 = vsel %vm573, %v566, %v570
        %v575 = vand.u32 2147483647, %v342
        %vm576 = vcmp.eq.f32.partialorder %v575, 8.507059e+37
        %v577 = vand.u32 %v342, 2147483648
        %v578 = vor.u32 1.1754944e-38, %v577
        %v579 = vsel %vm576, %v578, %v574
        %v580 = vmul.f32 %v440, %v579
        %v581 = vrcp.pop %v345
        %v582 = vmul.f32 %v345, %v581
        %v583 = vsub.f32 1.0, %v582
        %v584 = vmul.f32 %v581, %v583
        %v585 = vadd.f32 %v581, %v584
        %vm586 = vweird.f32 %v345
        %vm587 = vweird.f32 %v581
        %vm588 = vmor %vm586, %vm587
        %v589 = vsel %vm588, %v581, %v585
        %v590 = vand.u32 2147483647, %v345
        %vm591 = vcmp.eq.f32.partialorder %v590, 8.507059e+37
        %v592 = vand.u32 %v345, 2147483648
        %v593 = vor.u32 1.1754944e-38, %v592
        %v594 = vsel %vm591, %v593, %v589
        %v595 = vmul.f32 %v443, %v594
        %v596 = vsub.f32 1.0, %v490
        %v597 = vsub.f32 1.0, %v505
        %v598 = vsub.f32 1.0, %v520
        %v599 = vsub.f32 1.0, %v535
        %v600 = vsub.f32 1.0, %v550
        %v601 = vsub.f32 1.0, %v565
        %v602 = vsub.f32 1.0, %v580
        %v603 = vsub.f32 1.0, %v595
        %v604 = vmul.f32 %v596, %v596
        %v605 = vmul.f32 %v597, %v597
        %v606 = vmul.f32 %v598, %v598
        %v607 = vmul.f32 %v599, %v599
        %v608 = vmul.f32 %v600, %v600
        %v609 = vmul.f32 %v601, %v601
        %v610 = vmul.f32 %v602, %v602
        %v611 = vmul.f32 %v603, %v603
        %v612 = vmul.f32 %v604, %v468
        %v613 = vmul.f32 %v605, %v469
        %v614 = vmul.f32 %v606, %v470
        %v615 = vmul.f32 %v607, %v471
        %v616 = vmul.f32 %v608, %v472
        %v617 = vmul.f32 %v609, %v473
        %v618 = vmul.f32 %v610, %v474
        %v619 = vmul.f32 %v611, %v475
        %v620 = vsel %vm241, %v612, 0.0
        %v621 = vsel %vm242, %v613, 0.0
        %v622 = vsel %vm243, %v614, 0.0
        %v623 = vsel %vm244, %v615, 0.0
        %v624 = vsel %vm245, %v616, 0.0
        %v625 = vsel %vm246, %v617, 0.0
        %v626 = vsel %vm247, %v618, 0.0
        %v627 = vsel %vm248, %v619, 0.0
        %vm628 = vcmask 7168
        %v629 = vsel %vm628, %v620, 0.0
        %v630 = vsel %vm628, %v621, 0.0
        %v631 = vadd.f32 %v629, %v630
        %v632 = vsel %vm628, %v622, 0.0
        %v633 = vadd.f32 %v631, %v632
        %v634 = vsel %vm628, %v623, 0.0
        %v635 = vadd.f32 %v633, %v634
        %v636 = vsel %vm628, %v624, 0.0
        %v637 = vadd.f32 %v635, %v636
        %v638 = vsel %vm628, %v625, 0.0
        %v639 = vadd.f32 %v637, %v638
        %v640 = vsel %vm628, %v626, 0.0
        %v641 = vadd.f32 %v639, %v640
        %v642 = vsel %vm628, %v627, 0.0
        %v643 = vadd.f32 %v641, %v642
        %644 = vadd.xlane.f32.xlu0 %v643
        %v645 = vpop.xlane.xlu0 %644
        %v646 = vrot.slane %v645, 4
        %v647 = vadd.f32 %v645, %v646
        %v648 = vrot.slane %v647, 2
        %v649 = vadd.f32 %v647, %v648
        %v650 = vrot.slane %v649, 1
        %v651 = vadd.f32 %v649, %v650
        %s652 = vtos %v651
        %v653 = vstv %s652
        %654 = vst [vmem:[%s177] sm:$0xff] %v653
        %s655 = sand.u32 %s76, 1
        %s656 = scalar_lea.sflag [#allocation3], %s655
        %s657 = sand.u32 %s76, 1
        %s658 = smul.addr %s657, 8
        %s659 = scalar_lea.vmem [#allocation2], %s658
        // Predicated region
        $region29: #{tpu_custom_call.1} parent=27 // pred_check
          %p660 = pneg %p86
        $region30: #{tpu_custom_call.1} parent=27 // pred_check_branch
          %662 = sbr.rel (%p660) target = $region32
        $region31: #{tpu_custom_call.1} parent=27 // pred_region
          %664 = vsyncadd %s656, 0
          %s665 = smul.addr %s16, 8
          %s666 = scalar_lea.hbm %s2, %s665
          %s668 = sshll.u32 %s659, 4
          %s669 = int_to_ptr.vmem [resolvable:$true] %s668
          %s670 = sshll.u32 %s666, 4
          %s671 = int_to_ptr.hbm [resolvable:$true] %s670
          %673 = dma.vmem_to_hbm [thread:$0]  %s669, 128, %s671, %s656
        $region32: #{tpu_custom_call.1} parent=27 // pred_fallthru
          _
      $region28: #{tpu_custom_call.1} parent=5 // pred_fallthru
        _
      %p674 = scmp.le.s32.totalorder 2, %s11
      // Predicated region
      $region33: #{tpu_custom_call.1} parent=5 // pred_check
        %p675 = pneg %p674
      $region34: #{tpu_custom_call.1} parent=5 // pred_check_branch
        %677 = sbr.rel (%p675) target = $region36
      $region35: #{tpu_custom_call.1} parent=5 // pred_region
        %s678 = ssub.s32 %s11, 2
        // Predicated region
        $region37: #{tpu_custom_call.1} parent=35 // pred_check
          %p679 = pneg %p92
        $region38: #{tpu_custom_call.1} parent=35 // pred_check_branch
          %681 = sbr.rel (%p679) target = $region40
        $region39: #{tpu_custom_call.1} parent=35 // pred_region
          %s682 = sand.u32 %s77, 1
          %s683 = scalar_lea.sflag [#allocation3], %s682
          %s684 = sand.u32 %s77, 1
          %s685 = smul.addr %s684, 8
          %s686 = scalar_lea.vmem [#allocation2], %s685
          %688 = dma.done %s683, 128
        $region40: #{tpu_custom_call.1} parent=35 // pred_fallthru
          _
      $region36: #{tpu_custom_call.1} parent=5 // pred_fallthru
        _
    $region6: #{tpu_custom_call.1} parent=1 // loop_footer
      %s15 = sadd.s32 1, %s11
    $region7: #{tpu_custom_call.1} parent=1 // loop_footer_branch
      %10 = sbr.rel target = $region3
    $region8: #{tpu_custom_call.1} parent=1 // loop_exit
      _
    %689 = vsyncpa [#allocation3], 1
    %s690 = scalar_lea.sflag [#allocation3], 1
    %691 = vsyncpa %s690, 1

</llo_original>
